<compile_context>
chip_gen: v7x
topology: tpu7x:2x2x1
jax: 0.10.0
libtpu: 0.0.40
codegen_flags: <defaults>
</compile_context>

<pallas_src>
import functools
import math

import jax
import jax.numpy as jnp
from jax.experimental import pallas as pl
from jax.experimental.pallas import tpu as pltpu


def _round_up(x: int, m: int) -> int:
    return ((x + m - 1) // m) * m


def _num_tensorcores_per_chip() -> int:
    """Best-effort query: 2 TCs/chip on v7x, 1 on v5e/v6e. Defaults to 1."""
    try:
        dev = jax.devices()[0]
    except Exception:  # pragma: no cover - no devices during tracing-only use
        return 1
    n = getattr(dev, "num_cores", None)
    if isinstance(n, int) and n > 0:
        return n
    kind = str(getattr(dev, "device_kind", "")).lower()
    if "v7" in kind:
        return 2
    return 1


def diffusion_embedding_kernel(step_ref, w_ref, b_ref, out_ref, *, dim):
    # step_ref: (TB, 1)                f32   diffusion steps (batch tile)
    # w_ref:    (two_dim_pad, P_pad)   bf16  projection weight, canonical layout, resident
    # b_ref:    (1, P_pad)             f32   projection bias, resident
    # out_ref:  (TB, P_pad)            f32
    two_dim_pad = w_ref.shape[0]
    neg_log1000_over_dim = -math.log(1000.0) / dim  # compile-time scalar

    # Lane iota over the (padded) doubled feature dim: lanes [0, dim) -> sin,
    # lanes [dim, 2*dim) -> cos of the same frequency table (no lane concat).
    # Padded lanes (>= 2*dim) produce finite values that hit zero weight rows.
    lane = jax.lax.broadcasted_iota(jnp.int32, (1, two_dim_pad), 1)   # (1, Kp)
    is_sin = lane < dim                                               # (1, Kp)
    idx = jnp.where(is_sin, lane, lane - dim).astype(jnp.float32)     # (1, Kp)
    freq2 = jnp.exp(idx * neg_log1000_over_dim)                       # (1, Kp)  EUP

    emb2 = step_ref[...] * freq2                                      # (TB, Kp) lane-broadcast
    feats = jnp.where(is_sin, jnp.sin(emb2), jnp.cos(emb2))           # (TB, Kp) VPU/EUP

    # (TB, Kp) bf16  @  (Kp, Pp) bf16  ->  (TB, Pp) f32 accumulate on the MXU.
    out = jnp.dot(
        feats.astype(jnp.bfloat16),
        w_ref[...],
        preferred_element_type=jnp.float32,
    )
    out_ref[...] = out + b_ref[...]


def diffusion_embedding(diffusion_step, weight, bias, dim, *, block_b=None):
    """diffusion_step: (B,); weight: (P, 2*dim) (PyTorch nn.Linear layout); bias: (P,)."""
    B = diffusion_step.shape[0]
    P, two_dim = weight.shape
    assert two_dim == 2 * dim, "weight must be (projection_dim, 2*dim)"

    # Lane-dense padded sizes (multiples of 128 on both matmul minor dims).
    two_dim_pad = _round_up(two_dim, 128)
    p_pad = _round_up(P, 128)

    # Wrapper-side normalization (one-time; could live at parameter init):
    #   * transpose to canonical (2*dim, P), zero-pad, cast weight to bf16,
    #   * pad bias, reshape step to (B, 1).
    step_2d = diffusion_step.astype(jnp.float32).reshape(B, 1)
    w_t = jnp.transpose(weight.astype(jnp.float32))                   # (2*dim, P)
    w_t = jnp.pad(w_t, ((0, two_dim_pad - two_dim), (0, p_pad - P)))
    w_t = w_t.astype(jnp.bfloat16)                                    # (Kp, Pp) bf16
    b_2d = jnp.pad(bias.astype(jnp.float32), (0, p_pad - P)).reshape(1, p_pad)

    # Batch tile policy:
    #   * dual-TC chips (v7x): split into one tile per TC when the batch is
    #     large enough and splits into multiple-of-8 tiles,
    #   * single-TC chips (v5e/v6e): one grid step (per-step overhead dominates).
    if block_b is None:
        num_tc = _num_tensorcores_per_chip()
        if (num_tc >= 2 and B >= 8 * num_tc and B % num_tc == 0
                and (B // num_tc) % 8 == 0):
            block_b = B // num_tc
        else:
            block_b = B
    if B % block_b != 0 or (block_b != B and block_b % 8 != 0):
        block_b = B
    grid_steps = B // block_b
    grid = (grid_steps,)

    cost = pl.CostEstimate(
        flops=2 * B * two_dim_pad * p_pad + B * p_pad,
        transcendentals=2 * B * two_dim_pad + grid_steps * two_dim_pad,  # sin+cos; exp once/step
        bytes_accessed=4 * B + 2 * two_dim_pad * p_pad + 4 * p_pad + 4 * B * p_pad,
    )

    kernel = functools.partial(diffusion_embedding_kernel, dim=dim)

    out_padded = pl.pallas_call(
        kernel,
        out_shape=jax.ShapeDtypeStruct((B, p_pad), jnp.float32),
        grid=grid,
        in_specs=[
            pl.BlockSpec((block_b, 1), lambda i: (i, 0)),           # step tile
            pl.BlockSpec((two_dim_pad, p_pad), lambda i: (0, 0)),   # weight, resident
            pl.BlockSpec((1, p_pad), lambda i: (0, 0)),             # bias, resident
        ],
        out_specs=pl.BlockSpec((block_b, p_pad), lambda i: (i, 0)),
        compiler_params=pltpu.CompilerParams(
            dimension_semantics=("parallel",),    # shard batch tiles across TCs (v7x)
        ),
        cost_estimate=cost,
    )(step_2d, w_t, b_2d)

    if p_pad != P:
        return out_padded[:, :P]
    return out_padded


def reference(diffusion_step, weight, bias, dim):
    x = jnp.log(jnp.float32(1000.0))
    idx = jnp.arange(dim, dtype=jnp.float32)
    emb = diffusion_step[:, None].astype(jnp.float32) * jnp.exp(-idx[None, :] * x / dim)
    feats = jnp.concatenate([jnp.sin(emb), jnp.cos(emb)], axis=-1)
    return feats @ weight.T + bias


if __name__ == "__main__":
    key = jax.random.PRNGKey(0)
    k1, k2, k3 = jax.random.split(key, 3)

    dim = 16             # self.dim
    projection_dim = 32  # self.projection_dim
    batch = 8

    # Deterministic synthetic parameters (nn.Linear(dim*2, projection_dim) shapes).
    weight = jax.random.normal(k1, (projection_dim, 2 * dim), dtype=jnp.float32) * 0.1
    bias = jax.random.normal(k2, (projection_dim,), dtype=jnp.float32) * 0.1

    # Diffusion steps (float, like the torch diffusion_step tensor).
    diffusion_step = jax.random.randint(k3, (batch,), 0, 100).astype(jnp.float32)

    out = diffusion_embedding(diffusion_step, weight, bias, dim)
    out = jax.block_until_ready(out)

    ref = reference(diffusion_step, weight, bias, dim)
    assert out.shape == (batch, projection_dim)
    # bf16 MXU operands -> loosened tolerance (sin/cos are in [-1, 1]).
    assert jnp.allclose(out, ref, atol=2e-2, rtol=2e-2), "mismatch vs reference"

    print("KERNEL_OK")
</pallas_src>

<mosaic_0001>
module attributes {stable_mosaic.version = 11 : i64} {
  func.func @diffusion_embedding_kernel(%arg0: i32, %arg1: memref<8x1xf32, #tpu.memory_space<vmem>>, %arg2: memref<128x128xbf16, #tpu.memory_space<vmem>>, %arg3: memref<1x128xf32, #tpu.memory_space<vmem>>, %arg4: memref<8x128xf32, #tpu.memory_space<vmem>>) attributes {dimension_semantics = [#tpu.dimension_semantics<parallel>], iteration_bounds = array<i64: 1>, scalar_prefetch = 0 : i64, scratch_operands = 0 : i64, tpu.core_type = #tpu.core_type<tc>, window_params = [{transform_indices = @transform_0, window_bounds = array<i64: 8, 1>}, {pipeline_mode = #tpu.pipeline_mode<synchronous>, transform_indices = @transform_1, window_bounds = array<i64: 128, 128>}, {pipeline_mode = #tpu.pipeline_mode<synchronous>, transform_indices = @transform_2, window_bounds = array<i64: 1, 128>}, {transform_indices = @transform_3, window_bounds = array<i64: 8, 128>}]} {
    %0 = tpu.iota {dimensions = array<i32: 1>} : vector<1x128xi32>
    %c16_i32 = arith.constant 16 : i32
    %1 = vector.broadcast %c16_i32 : i32 to vector<1x128xi32>
    %2 = arith.cmpi slt, %0, %1 : vector<1x128xi32>
    %c16_i32_0 = arith.constant 16 : i32
    %3 = vector.broadcast %c16_i32_0 : i32 to vector<1x128xi32>
    %4 = arith.subi %0, %3 : vector<1x128xi32>
    %5 = arith.select %2, %0, %4 : vector<1x128xi1>, vector<1x128xi32>
    %6 = arith.sitofp %5 : vector<1x128xi32> to vector<1x128xf32>
    %cst = arith.constant -0.431734711 : f32
    %7 = vector.broadcast %cst : f32 to vector<1x128xf32>
    %8 = arith.mulf %6, %7 : vector<1x128xf32>
    %9 = math.exp %8 : vector<1x128xf32>
    %c0 = arith.constant 0 : index
    %c0_1 = arith.constant 0 : index
    %10 = vector.load %arg1[%c0, %c0_1] : memref<8x1xf32, #tpu.memory_space<vmem>>, vector<8x1xf32>
    %11 = vector.broadcast %10 : vector<8x1xf32> to vector<8x128xf32>
    %12 = vector.broadcast %9 : vector<1x128xf32> to vector<8x128xf32>
    %13 = arith.mulf %11, %12 : vector<8x128xf32>
    %14 = math.sin %13 : vector<8x128xf32>
    %15 = math.cos %13 : vector<8x128xf32>
    %16 = vector.shape_cast %2 : vector<1x128xi1> to vector<1x128xi1>
    %17 = vector.broadcast %16 : vector<1x128xi1> to vector<8x128xi1>
    %18 = arith.select %17, %14, %15 : vector<8x128xi1>, vector<8x128xf32>
    %19 = arith.truncf %18 : vector<8x128xf32> to vector<8x128xbf16>
    %c0_2 = arith.constant 0 : index
    %c0_3 = arith.constant 0 : index
    %20 = vector.load %arg2[%c0_2, %c0_3] : memref<128x128xbf16, #tpu.memory_space<vmem>>, vector<128x128xbf16>
    %cst_4 = arith.constant dense<0.000000e+00> : vector<8x128xf32>
    %21 = tpu.matmul %19, %20, %cst_4 {dimension_numbers = #tpu.dot_dimension_numbers<[1], [0], [0], [1], [0, 0, 1, 1], [], []>} : vector<8x128xbf16>, vector<128x128xbf16>, vector<8x128xf32> -> vector<8x128xf32>
    %c0_5 = arith.constant 0 : index
    %c0_6 = arith.constant 0 : index
    %22 = vector.load %arg3[%c0_5, %c0_6] : memref<1x128xf32, #tpu.memory_space<vmem>>, vector<1x128xf32>
    %23 = vector.broadcast %22 : vector<1x128xf32> to vector<8x128xf32>
    %24 = arith.addf %21, %23 : vector<8x128xf32>
    %c0_7 = arith.constant 0 : index
    %c0_8 = arith.constant 0 : index
    %25 = vector.load %arg4[%c0_7, %c0_8] : memref<8x128xf32, #tpu.memory_space<vmem>>, vector<8x128xf32>
    tpu.vector_store %arg4[%c0_7, %c0_8], %24 {strides = array<i32>} : memref<8x128xf32, #tpu.memory_space<vmem>>, vector<8x128xf32>,
    return
  }
  func.func @transform_0(%arg0: i32) -> (i32, i32) {
    %c0_i32 = arith.constant 0 : i32
    %c0_i32_0 = arith.constant 0 : i32
    return %arg0, %c0_i32 : i32, i32
  }
  func.func @transform_1(%arg0: i32) -> (i32, i32) {
    %c0_i32 = arith.constant 0 : i32
    %c0_i32_0 = arith.constant 0 : i32
    %c0_i32_1 = arith.constant 0 : i32
    return %c0_i32, %c0_i32_0 : i32, i32
  }
  func.func @transform_2(%arg0: i32) -> (i32, i32) {
    %c0_i32 = arith.constant 0 : i32
    %c0_i32_0 = arith.constant 0 : i32
    %c0_i32_1 = arith.constant 0 : i32
    return %c0_i32, %c0_i32_0 : i32, i32
  }
  func.func @transform_3(%arg0: i32) -> (i32, i32) {
    %c0_i32 = arith.constant 0 : i32
    %c0_i32_0 = arith.constant 0 : i32
    return %arg0, %c0_i32 : i32, i32
  }
}

</mosaic_0001>

<llo_original>
// kernel: tpu_custom_call.1
$region0: #{tpu_custom_call.1}
  #allocation0 [shape = 'u32[]', space=smem, size = 0x4, offset = 0x4, fixed_abs, tag = 'smem constant byte address 0x4 - core index']
  #allocation1 [shape = 'u32[144,128]{1,0:T(1,128)}', space=vmem, size = 0x12000, scoped, tag = 'internal scratch']
  %s0 = inlined_call_operand.vmem [shape: f32[8,1], index: 0, kind: input, shape index: {}]
  %s1 = inlined_call_operand.hbm [shape: bf16[128,128], index: 1, kind: input, shape index: {}]
  %s2 = inlined_call_operand.vmem [shape: f32[1,128], index: 2, kind: input, shape index: {}]
  %s3 = inlined_call_operand.hbm [shape: f32[8,128], index: 3, kind: output, shape index: {}]
  %s4 = sld [smem:[#allocation0]]
  $region26: #{tpu_custom_call.1} parent=0
    _
  %s6 = ssub.s32 1, %s4
  %s7 = scalar_select 0, %s6, %s4
  $region1: #{tpu_custom_call.1} parent=0
    #allocation2 [shape = 'u8[32768]{0}', space=vmem, size = 0x8000, scoped, tag = 'input window, operand 1, single buffered']
    #allocation3 [shape = 's32[1]{0}', space=sflag, size = 0x4, scoped, tag = 'scoped memory for tpu_custom_call.1']
    #allocation4 [shape = 's32[1]{0}', space=sflag, size = 0x4, scoped, tag = 'scoped memory for tpu_custom_call.1']
    #allocation5 [shape = 'u8[4096]{0}', space=vmem, size = 0x1000, scoped, tag = 'output window, operand 0, single buffered']
    %8 = vsyncpa [#allocation3], 0
    %9 = vsyncpa [#allocation4], 0
    // Predicated region
    $region2: #{tpu_custom_call.1} parent=1 // pred_check
      _
    $region3: #{tpu_custom_call.1} parent=1 // pred_check_branch
      %11 = sbr.rel (0) target = $region5
    $region4: #{tpu_custom_call.1} parent=1 // pred_region
      _
    $region5: #{tpu_custom_call.1} parent=1 // pred_fallthru
      _
    // Predicated region
    $region6: #{tpu_custom_call.1} parent=1 // pred_check
      _
    $region7: #{tpu_custom_call.1} parent=1 // pred_check_branch
      %13 = sbr.rel (0) target = $region9
    $region8: #{tpu_custom_call.1} parent=1 // pred_region
      %s15 = ssub.s32 1024, 1024
      %16 = vsyncadd [#allocation3], %s15
      %s17 = sshll.u32 [#allocation2], 4
      %s18 = int_to_ptr.vmem [resolvable:$true] %s17
      %23 = dma.hbm_to_vmem [thread:$0]  %s1, 1024, %s18, [#allocation3], 64, 64, 4
    $region9: #{tpu_custom_call.1} parent=1 // pred_fallthru
      _
    // Predicated region
    $region10: #{tpu_custom_call.1} parent=1 // pred_check
      _
    $region11: #{tpu_custom_call.1} parent=1 // pred_check_branch
      %25 = sbr.rel (0) target = $region13
    $region12: #{tpu_custom_call.1} parent=1 // pred_region
      _
    $region13: #{tpu_custom_call.1} parent=1 // pred_fallthru
      _
    // Predicated region
    $region14: #{tpu_custom_call.1} parent=1 // pred_check
      _
    $region15: #{tpu_custom_call.1} parent=1 // pred_check_branch
      %27 = sbr.rel (0) target = $region17
    $region16: #{tpu_custom_call.1} parent=1 // pred_region
      %28 = dma.done [#allocation3], 1024
    $region17: #{tpu_custom_call.1} parent=1 // pred_fallthru
      _
    %v30 = vlaneseq
    %v31 = vand.u32 %v30, 127
    %vm32 = vcmp.lt.s32.totalorder %v31, 16
    %v33 = vsub.s32 %v31, 16
    %v34 = vsel %vm32, %v31, %v33
    %v35 = vcvt.s32.f32 %v34
    %v36 = vmul.f32 %v35, -0.4317347
    %v37 = vmul.f32 %v36, 1.442695
    %v38 = vpow.pop %v37
    %v39 = vld [vmem:[%s0] sm:$0xff]
    %41 = vset.pattern.permute.xlu0 0
    %42 = vperm.xlu0 %41, %v39
    %v43 = vpop.permute.xlu0 %42
    %v45 = vmul.f32 %v43, %v38
    %v46 = vand.u32 2147483647, %v45
    %vm47 = vcmp.le.f32.partialorder %v46, 0.7853982
    %vm48 = vcmp.lt.s32.totalorder %v45, 0
    %v49 = vand.u32 %v45, 2139095040
    %v50 = vshrl.u32 %v49, 23
    %v51 = vsub.s32 %v50, 127
    %v52 = vand.u32 2147483647, %v45
    %v53 = vand.u32 %v52, 8388607
    %v54 = vor.u32 %v53, 8388608
    %v55 = vsub.s32 0, %v54
    %v56 = vadd.s32 %v51, 1
    %vm57 = vcmp.gt.s32.totalorder %v56, 0
    %v58 = vsel %vm57, %v56, 0
    %v59 = vshrl.u32 %v58, 5
    %v60 = vand.u32 %v58, 31
    %v61 = vsub.s32 32, %v60
    %v62 = vshrl.u32 683565275, %v61
    %v63 = vshll.u32 683565275, %v60
    %v64 = vshrl.u32 2475754826, %v61
    %v65 = vor.u32 %v63, %v64
    %v66 = vshll.u32 2475754826, %v60
    %v67 = vshrl.u32 2131351028, %v61
    %v68 = vor.u32 %v66, %v67
    %v69 = vshll.u32 2131351028, %v60
    %v70 = vshrl.u32 2102212464, %v61
    %v71 = vor.u32 %v69, %v70
    %v72 = vshll.u32 2102212464, %v60
    %v73 = vshrl.u32 920167782, %v61
    %v74 = vor.u32 %v72, %v73
    %v75 = vshll.u32 920167782, %v60
    %v76 = vshrl.u32 1326507024, %v61
    %v77 = vor.u32 %v75, %v76
    %vm78 = vcmp.lt.s32.totalorder %v59, 1
    %vm79 = vcmp.lt.s32.totalorder %v59, 2
    %vm80 = vcmp.lt.s32.totalorder %v59, 3
    %vm81 = vcmp.lt.s32.totalorder %v59, 4
    %v82 = vsel %vm78, %v62, %v65
    %v83 = vsel %vm81, %v71, 2102212464
    %v84 = vsel %vm80, %v68, %v83
    %v85 = vsel %vm79, %v82, %v84
    %v86 = vsel %vm78, %v65, %v68
    %v87 = vsel %vm81, %v74, 920167782
    %v88 = vsel %vm80, %v71, %v87
    %v89 = vsel %vm79, %v86, %v88
    %v90 = vsel %vm78, %v68, %v71
    %v91 = vsel %vm81, %v77, 1326507024
    %v92 = vsel %vm80, %v74, %v91
    %v93 = vsel %vm79, %v90, %v92
    %v94 = vshll.u32 %v54, 8
    %v95 = vmul.u32.u64.compose %v94, %v93
    %v96 = vextract.low.u32 %v95
    %v97 = vextract.high.u32 %v95
    %v98 = vmul.u32.u64.compose %v94, %v89
    %v99 = vextract.low.u32 %v98
    %v100 = vextract.high.u32 %v98
    %v101 = vmul.u32 %v94, %v85
    %v102 = vadd.s32 %v97, %v99
    %vm103 = vc.u32 %v97, %v99
    %v104 = vadd.s32 %v100, 1
    %v105 = vsel %vm103, %v104, %v100
    %v106 = vadd.s32 %v101, %v105
    %v107 = vadd.s32 %v106, 536870912
    %v108 = vshrl.u32 %v107, 30
    %v109 = vshll.u32 %v108, 30
    %v110 = vsub.s32 %v106, %v109
    %vm111 = vcmp.lt.s32.totalorder %v110, 0
    %v112 = vsub.s32 0, %v110
    %v113 = vsel %vm111, %v112, %v110
    %v114 = vclz %v113
    %v115 = vsub.s32 %v114, 2
    %vm116 = vcmp.gt.s32.totalorder 0, %v115
    %v117 = vsel %vm116, 0, %v115
    %v118 = vsub.s32 32, %v117
    %v119 = vshll.u32 %v110, %v117
    %v120 = vshrl.u32 %v102, %v118
    %v121 = vor.u32 %v119, %v120
    %v122 = vsub.s32 4294967266, %v117
    %v123 = vadd.s32 %v122, 127
    %v124 = vshll.u32 %v123, 23
    %v125 = vor.u32 4788187, %v124
    %v126 = vand.u32 2147483647, %v125
    %v128 = vcvt.s32.f32 %v121
    %v129 = vmul.f32 %v128, %v126
    %v130 = vxor.u32 %v129, 2147483648
    %v131 = vsel %vm48, %v130, %v129
    %v132 = vsub.s32 4, %v108
    %v133 = vsel %vm48, %v132, %v108
    %v134 = vsel %vm47, %v45, %v131
    %v135 = vsel %vm47, 0, %v133
    %v136 = vcosq.f32.pop %v134
    %v137 = vsinq.f32.pop %v134
    %vm138 = vweird.f32 %v45
    %v139 = vadd.s32 %v135, 3
    %v140 = vand.u32 %v139, 3
    %vm141 = vcmp.lt.s32.totalorder %v140, 2
    %vm142 = vcmp.eq.s32.totalorder %v140, 0
    %v143 = vxor.u32 %v137, 2147483648
    %v144 = vsel %vm142, %v136, %v143
    %vm145 = vcmp.eq.s32.totalorder %v140, 2
    %v146 = vxor.u32 %v136, 2147483648
    %v147 = vsel %vm145, %v146, %v137
    %v148 = vsel %vm141, %v144, %v147
    %v149 = vsel %vm138, nan, %v148
    %v150 = vand.u32 2147483647, %v45
    %vm151 = vcmp.le.f32.partialorder %v150, 0.7853982
    %vm152 = vcmp.lt.s32.totalorder %v45, 0
    %v153 = vand.u32 %v45, 2139095040
    %v154 = vshrl.u32 %v153, 23
    %v155 = vsub.s32 %v154, 127
    %v156 = vand.u32 2147483647, %v45
    %v157 = vand.u32 %v156, 8388607
    %v158 = vor.u32 %v157, 8388608
    %v159 = vsub.s32 0, %v158
    %v160 = vadd.s32 %v155, 1
    %vm161 = vcmp.gt.s32.totalorder %v160, 0
    %v162 = vsel %vm161, %v160, 0
    %v163 = vshrl.u32 %v162, 5
    %v164 = vand.u32 %v162, 31
    %v165 = vsub.s32 32, %v164
    %v166 = vshrl.u32 683565275, %v165
    %v167 = vshll.u32 683565275, %v164
    %v168 = vshrl.u32 2475754826, %v165
    %v169 = vor.u32 %v167, %v168
    %v170 = vshll.u32 2475754826, %v164
    %v171 = vshrl.u32 2131351028, %v165
    %v172 = vor.u32 %v170, %v171
    %v173 = vshll.u32 2131351028, %v164
    %v174 = vshrl.u32 2102212464, %v165
    %v175 = vor.u32 %v173, %v174
    %v176 = vshll.u32 2102212464, %v164
    %v177 = vshrl.u32 920167782, %v165
    %v178 = vor.u32 %v176, %v177
    %v179 = vshll.u32 920167782, %v164
    %v180 = vshrl.u32 1326507024, %v165
    %v181 = vor.u32 %v179, %v180
    %vm182 = vcmp.lt.s32.totalorder %v163, 1
    %vm183 = vcmp.lt.s32.totalorder %v163, 2
    %vm184 = vcmp.lt.s32.totalorder %v163, 3
    %vm185 = vcmp.lt.s32.totalorder %v163, 4
    %v186 = vsel %vm182, %v166, %v169
    %v187 = vsel %vm185, %v175, 2102212464
    %v188 = vsel %vm184, %v172, %v187
    %v189 = vsel %vm183, %v186, %v188
    %v190 = vsel %vm182, %v169, %v172
    %v191 = vsel %vm185, %v178, 920167782
    %v192 = vsel %vm184, %v175, %v191
    %v193 = vsel %vm183, %v190, %v192
    %v194 = vsel %vm182, %v172, %v175
    %v195 = vsel %vm185, %v181, 1326507024
    %v196 = vsel %vm184, %v178, %v195
    %v197 = vsel %vm183, %v194, %v196
    %v198 = vshll.u32 %v158, 8
    %v199 = vmul.u32.u64.compose %v198, %v197
    %v200 = vextract.low.u32 %v199
    %v201 = vextract.high.u32 %v199
    %v202 = vmul.u32.u64.compose %v198, %v193
    %v203 = vextract.low.u32 %v202
    %v204 = vextract.high.u32 %v202
    %v205 = vmul.u32 %v198, %v189
    %v206 = vadd.s32 %v201, %v203
    %vm207 = vc.u32 %v201, %v203
    %v208 = vadd.s32 %v204, 1
    %v209 = vsel %vm207, %v208, %v204
    %v210 = vadd.s32 %v205, %v209
    %v211 = vadd.s32 %v210, 536870912
    %v212 = vshrl.u32 %v211, 30
    %v213 = vshll.u32 %v212, 30
    %v214 = vsub.s32 %v210, %v213
    %vm215 = vcmp.lt.s32.totalorder %v214, 0
    %v216 = vsub.s32 0, %v214
    %v217 = vsel %vm215, %v216, %v214
    %v218 = vclz %v217
    %v219 = vsub.s32 %v218, 2
    %vm220 = vcmp.gt.s32.totalorder 0, %v219
    %v221 = vsel %vm220, 0, %v219
    %v222 = vsub.s32 32, %v221
    %v223 = vshll.u32 %v214, %v221
    %v224 = vshrl.u32 %v206, %v222
    %v225 = vor.u32 %v223, %v224
    %v226 = vsub.s32 4294967266, %v221
    %v227 = vadd.s32 %v226, 127
    %v228 = vshll.u32 %v227, 23
    %v229 = vor.u32 4788187, %v228
    %v230 = vand.u32 2147483647, %v229
    %v232 = vcvt.s32.f32 %v225
    %v233 = vmul.f32 %v232, %v230
    %v234 = vxor.u32 %v233, 2147483648
    %v235 = vsel %vm152, %v234, %v233
    %v236 = vsub.s32 4, %v212
    %v237 = vsel %vm152, %v236, %v212
    %v238 = vsel %vm151, %v45, %v235
    %v239 = vsel %vm151, 0, %v237
    %v240 = vcosq.f32.pop %v238
    %v241 = vsinq.f32.pop %v238
    %vm242 = vweird.f32 %v45
    %v243 = vand.u32 %v239, 3
    %vm244 = vcmp.lt.s32.totalorder %v243, 2
    %vm245 = vcmp.eq.s32.totalorder %v243, 0
    %v246 = vxor.u32 %v241, 2147483648
    %v247 = vsel %vm245, %v240, %v246
    %vm248 = vcmp.eq.s32.totalorder %v243, 2
    %v249 = vxor.u32 %v240, 2147483648
    %v250 = vsel %vm248, %v249, %v241
    %v251 = vsel %vm244, %v247, %v250
    %v252 = vsel %vm242, nan, %v251
    %v253 = vsel %vm32, 1, 0
    %vm254 = vcmp.eq.s32.totalorder %v253, 1
    %v255 = vsel %vm254, %v149, %v252
    %v256 = vpack.c.bf16 %v255, %v255
    %v257 = vld [vmem:[#allocation2] sm:$0xf]
    %v258 = vld [vmem:[#allocation2 + $0x4] sm:$0xf]
    %v259 = vld [vmem:[#allocation2 + $0x8] sm:$0xf]
    %v260 = vld [vmem:[#allocation2 + $0xc] sm:$0xf]
    %v261 = vld [vmem:[#allocation2 + $0x10] sm:$0xf]
    %v262 = vld [vmem:[#allocation2 + $0x14] sm:$0xf]
    %v263 = vld [vmem:[#allocation2 + $0x18] sm:$0xf]
    %v264 = vld [vmem:[#allocation2 + $0x1c] sm:$0xf]
    %v265 = vld [vmem:[#allocation2 + $0x20] sm:$0xf]
    %v266 = vld [vmem:[#allocation2 + $0x24] sm:$0xf]
    %v267 = vld [vmem:[#allocation2 + $0x28] sm:$0xf]
    %v268 = vld [vmem:[#allocation2 + $0x2c] sm:$0xf]
    %v269 = vld [vmem:[#allocation2 + $0x30] sm:$0xf]
    %v270 = vld [vmem:[#allocation2 + $0x34] sm:$0xf]
    %v271 = vld [vmem:[#allocation2 + $0x38] sm:$0xf]
    %v272 = vld [vmem:[#allocation2 + $0x3c] sm:$0xf]
    %v273 = vld [vmem:[%s2] sm:$0x1]
    %v275 = vlaneseq
    %v276 = vshrl.u32 %v275, 7
    %v277 = vsub.s32 0, %v276
    %v278 = vrot.slane %v273, %v277
    %v296 = vunpack.c.l.b16 %v257
    %v297 = vunpack.c.l.b16 %v258
    %v298 = vunpack.c.l.b16 %v259
    %v299 = vunpack.c.l.b16 %v260
    %v300 = vunpack.c.l.b16 %v261
    %v301 = vunpack.c.l.b16 %v262
    %v302 = vunpack.c.l.b16 %v263
    %v303 = vunpack.c.l.b16 %v264
    %v304 = vunpack.c.l.b16 %v265
    %v305 = vunpack.c.l.b16 %v266
    %v306 = vunpack.c.l.b16 %v267
    %v307 = vunpack.c.l.b16 %v268
    %v308 = vunpack.c.l.b16 %v269
    %v309 = vunpack.c.l.b16 %v270
    %v310 = vunpack.c.l.b16 %v271
    %v311 = vunpack.c.l.b16 %v272
    %v312 = vpack.c.b16 %v297, %v296
    %v313 = vpack.c.b16 %v299, %v298
    %v314 = vpack.c.b16 %v301, %v300
    %v315 = vpack.c.b16 %v303, %v302
    %v316 = vpack.c.b16 %v305, %v304
    %v317 = vpack.c.b16 %v307, %v306
    %v318 = vpack.c.b16 %v309, %v308
    %v319 = vpack.c.b16 %v311, %v310
    %328 = vmatprep.subr.bf16.mxu0 0
    %329 = vmatpush1.bf16.msra.mxu0 %v312
    %330 = vmatprep.subr.bf16.mxu0 0
    %331 = vmatpush1.bf16.msra.mxu0 %v313
    %332 = vmatprep.subr.bf16.mxu0 0
    %333 = vmatpush1.bf16.msra.mxu0 %v314
    %334 = vmatprep.subr.bf16.mxu0 0
    %335 = vmatpush1.bf16.msra.mxu0 %v315
    %336 = vmatprep.subr.bf16.mxu0 0
    %337 = vmatpush1.bf16.msra.mxu0 %v316
    %338 = vmatprep.subr.bf16.mxu0 0
    %339 = vmatpush1.bf16.msra.mxu0 %v317
    %340 = vmatprep.subr.bf16.mxu0 0
    %341 = vmatpush1.bf16.msra.mxu0 %v318
    %342 = vmatprep.subr.bf16.mxu0 0
    %343 = vmatpush1.bf16.msra.mxu0 %v319
    %344 = vmatprep.subr.bf16.mxu0 0
    %345 = vmatpush1.bf16.msra.mxu0 0
    %346 = vmatprep.subr.bf16.mxu0 0
    %347 = vmatpush1.bf16.msra.mxu0 0
    %348 = vmatprep.subr.bf16.mxu0 0
    %349 = vmatpush1.bf16.msra.mxu0 0
    %350 = vmatprep.subr.bf16.mxu0 0
    %351 = vmatpush1.bf16.msra.mxu0 0
    %352 = vmatprep.subr.bf16.mxu0 0
    %353 = vmatpush1.bf16.msra.mxu0 0
    %354 = vmatprep.subr.bf16.mxu0 0
    %355 = vmatpush1.bf16.msra.mxu0 0
    %356 = vmatprep.subr.bf16.mxu0 0
    %357 = vmatpush1.bf16.msra.mxu0 0
    %358 = vmatprep.subr.bf16.mxu0 0
    %359 = vmatpush1.bf16.msra.mxu0 0
    %360 = vmatprep.mubr.bf16.mxu0 0
    %361 = vmatmul.mubr.bf16.gmra.mrb[0].mxu0 %v256
    %v362 = vpop.f32.mrb[0].mxu0
    %v363 = vadd.f32 %v278, %v362
    %v364 = vpop.f32.mrb[0].mxu0
    %v365 = vpop.f32.mrb[0].mxu0
    %v366 = vpop.f32.mrb[0].mxu0
    %367 = vdwg.mxu0
    %368 = vst [vmem:[#allocation5] sm:$0xff] %v363
    // Predicated region
    $region18: #{tpu_custom_call.1} parent=1 // pred_check
      _
    $region19: #{tpu_custom_call.1} parent=1 // pred_check_branch
      %370 = sbr.rel (0) target = $region21
    $region20: #{tpu_custom_call.1} parent=1 // pred_region
      %s372 = ssub.s32 128, 128
      %373 = vsyncadd [#allocation4], %s372
      %s375 = sshll.u32 [#allocation5], 4
      %s376 = int_to_ptr.vmem [resolvable:$true] %s375
      %378 = dma.vmem_to_hbm [thread:$0]  %s376, 128, %s3, [#allocation4]
    $region21: #{tpu_custom_call.1} parent=1 // pred_fallthru
      _
    // Predicated region
    $region22: #{tpu_custom_call.1} parent=1 // pred_check
      _
    $region23: #{tpu_custom_call.1} parent=1 // pred_check_branch
      %380 = sbr.rel (0) target = $region25
    $region24: #{tpu_custom_call.1} parent=1 // pred_region
      %381 = dma.done [#allocation4], 128
    $region25: #{tpu_custom_call.1} parent=1 // pred_fallthru
      _
    %382 = vsyncpa [#allocation3], 1
    %383 = vsyncpa [#allocation4], 1

</llo_original>
